<compile_context>
chip_gen: v5e
topology: v5e:2x2
jax: 0.10.0
libtpu: 0.0.40
codegen_flags: <defaults>
</compile_context>

<pallas_src>
import functools
import math

import jax
import jax.numpy as jnp
from jax.experimental import pallas as pl
from jax.experimental.pallas import tpu as pltpu


def _round_up(a, b):
    return ((a + b - 1) // b) * b


def _balanced_tm(M, tm_req):
    """Balanced row-tile: avoid padding M up to a full fixed tm multiple."""
    tm_req = max(16, _round_up(tm_req, 16))
    if M <= tm_req:
        return max(16, _round_up(M, 16))
    n_blocks = math.ceil(M / tm_req)
    return _round_up(math.ceil(M / n_blocks), 16)


def _tpu_defaults():
    """Generation-aware default tiles and VMEM ceiling.

    Compute/memory ridge ~ 240 / 650 / 310 rows on v5e / v6e / v7x; physical
    VMEM 128 / 128 / 64 MiB.  Unknown chips get the conservative (v7x-safe)
    settings.
    """
    kind = ""
    try:
        kind = jax.devices()[0].device_kind.lower()
    except Exception:
        pass
    if "v7" in kind:
        tiles, cap = dict(tm=512, tn=512, tk=1024), 48 * 2**20
    elif "v6" in kind:
        tiles, cap = dict(tm=768, tn=512, tk=1024), 100 * 2**20
    elif "v5e" in kind or "v5 lite" in kind or "v5lite" in kind:
        tiles, cap = dict(tm=256, tn=512, tk=1024), 100 * 2**20
    else:
        tiles, cap = dict(tm=512, tn=512, tk=1024), 48 * 2**20
    try:  # refine ceiling from actual hardware info when available
        phys = int(pltpu.get_tpu_info().vmem_capacity_bytes)
        cap = int(min(cap, max(phys - 16 * 2**20, 16 * 2**20)))
    except Exception:
        pass
    return tiles, cap


# ---------------------------------------------------------------------------
# Kernels
# ---------------------------------------------------------------------------

def _lora_down_kernel(x_ref, w_down_ref, lx_ref, acc_ref):
    """lx = x @ W_down^T, accumulated over K tiles.  Grid: (M/tm, K/tk)."""
    k = pl.program_id(1)

    @pl.when(k == 0)
    def _():
        acc_ref[...] = jnp.zeros_like(acc_ref)

    acc_ref[...] += jnp.dot(x_ref[...], w_down_ref[...],
                            preferred_element_type=jnp.float32)

    @pl.when(k == pl.num_programs(1) - 1)
    def _():
        lx_ref[...] = acc_ref[...].astype(lx_ref.dtype)


def _lora_main_kernel(x_ref, w_org_ref, b_ref, lx_ref, w_up_ref, o_ref, acc_ref):
    """Fused frozen Linear + bias + LoRA up-projection.

    Grid: (M/tm, N/tn, K/tk), K innermost ("arbitrary"); M and N parallel.
      x_ref     : (tm, tk)      bf16 input rows, K-tile k
      w_org_ref : (tk, tn)      bf16 frozen weight tile (transposed layout)
      b_ref     : (1, tn)       f32 bias tile
      lx_ref    : (tm, r_pad)   bf16 precomputed down-projection (i only)
      w_up_ref  : (r_pad, tn)   bf16 lora_up tile, multiplier*scale pre-folded
      o_ref     : (tm, tn)      output tile
      acc_ref   : (tm, tn)      f32 accumulator scratch
    """
    k = pl.program_id(2)

    @pl.when(k == 0)
    def _():
        # Init the accumulator with bias + LoRA contribution: one rank-r MXU
        # op per (i, j) output tile; lx / w_up blocks change only with i / j.
        acc_ref[...] = (
            jnp.broadcast_to(b_ref[...].astype(jnp.float32), acc_ref.shape)
            + jnp.dot(lx_ref[...], w_up_ref[...],
                      preferred_element_type=jnp.float32))

    acc_ref[...] += jnp.dot(x_ref[...], w_org_ref[...],
                            preferred_element_type=jnp.float32)

    @pl.when(k == pl.num_programs(2) - 1)
    def _():
        o_ref[...] = acc_ref[...].astype(o_ref.dtype)


# ---------------------------------------------------------------------------
# Wrappers
# ---------------------------------------------------------------------------

def prepare_lora_linear(w_org, b_org, w_down, w_up, *, multiplier=1.0,
                        scale=1.0, tn=None, tk=None,
                        compute_dtype=jnp.bfloat16):
    """One-time (outside the hot path) transpose / pad / cast of the frozen
    Linear weight and LoRA factors.  PyTorch conventions:
      w_org (out, in), b_org (out,) or None, w_down (r, in), w_up (out, r).
    multiplier*scale is folded into the cached up-projection weight."""
    tiles, vmem_cap = _tpu_defaults()
    tn = tiles["tn"] if tn is None else tn
    tk = tiles["tk"] if tk is None else tk

    out_dim, in_dim = w_org.shape
    r = w_down.shape[0]

    tk_eff = _round_up(min(tk, _round_up(in_dim, 128)), 128)
    tn_eff = _round_up(min(tn, _round_up(out_dim, 128)), 128)
    r_pad = _round_up(r, 128)
    K_pad = _round_up(in_dim, tk_eff)
    N_pad = _round_up(out_dim, tn_eff)

    if b_org is None:
        b_org = jnp.zeros((out_dim,), jnp.float32)

    def pad2(a, rows, cols):
        return jnp.pad(a, ((0, rows - a.shape[0]), (0, cols - a.shape[1])))

    mult_scale = float(multiplier) * float(scale)
    w_org_t = pad2(w_org.T.astype(compute_dtype), K_pad, N_pad)       # (K, N)
    w_down_t = pad2(w_down.T.astype(compute_dtype), K_pad, r_pad)     # (K, r)
    w_up_t = pad2((w_up.T.astype(jnp.float32) * mult_scale)
                  .astype(compute_dtype), r_pad, N_pad)               # (r, N)
    b2 = pad2(b_org.reshape(1, out_dim).astype(jnp.float32), 1, N_pad)

    return dict(
        w_org_t=w_org_t, b2=b2, w_down_t=w_down_t, w_up_t=w_up_t,
        in_dim=in_dim, out_dim=out_dim, r_pad=r_pad,
        K_pad=K_pad, N_pad=N_pad, tk_eff=tk_eff, tn_eff=tn_eff,
        tm_default=tiles["tm"], vmem_cap=vmem_cap,
        compute_dtype=compute_dtype,
    )


def lora_linear_forward(x, prepared, *, tm=None):
    """x: (..., in_dim).  `prepared` from prepare_lora_linear (cached)."""
    in_dim = prepared["in_dim"]
    out_dim = prepared["out_dim"]
    K_pad, N_pad, r_pad = prepared["K_pad"], prepared["N_pad"], prepared["r_pad"]
    tk_eff, tn_eff = prepared["tk_eff"], prepared["tn_eff"]
    cd = prepared["compute_dtype"]
    vmem_cap = prepared["vmem_cap"]

    lead_shape = x.shape[:-1]
    assert x.shape[-1] == in_dim
    M = int(math.prod(lead_shape)) if lead_shape else 1

    tm_req = prepared["tm_default"] if tm is None else tm
    tm_eff = _balanced_tm(M, tm_req)
    M_pad = _round_up(M, tm_eff)

    out_dtype = x.dtype
    cd_bytes = jnp.dtype(cd).itemsize
    out_bytes = jnp.dtype(out_dtype).itemsize

    x2 = jnp.pad(x.reshape(M, in_dim).astype(cd),
                 ((0, M_pad - M), (0, K_pad - in_dim)))

    def _vmem_limit(need):
        # never below the actual double-buffered need; capped per generation
        return int(min(vmem_cap, max(32 * 2**20, int(1.5 * need))))

    # ---- stage 1: rank-r down projection  lx = x @ W_down^T ---------------
    need_dn = (2 * cd_bytes * (tm_eff * tk_eff + tk_eff * r_pad
                               + tm_eff * r_pad)
               + 4 * tm_eff * r_pad)
    lx = pl.pallas_call(
        _lora_down_kernel,
        out_shape=jax.ShapeDtypeStruct((M_pad, r_pad), cd),
        grid_spec=pltpu.PrefetchScalarGridSpec(
            num_scalar_prefetch=0,
            grid=(M_pad // tm_eff, K_pad // tk_eff),
            in_specs=[
                pl.BlockSpec((tm_eff, tk_eff), lambda i, k: (i, k)),   # x
                pl.BlockSpec((tk_eff, r_pad), lambda i, k: (k, 0)),    # W_down^T
            ],
            out_specs=pl.BlockSpec((tm_eff, r_pad), lambda i, k: (i, 0)),
            scratch_shapes=[pltpu.VMEM((tm_eff, r_pad), jnp.float32)],
        ),
        compiler_params=pltpu.CompilerParams(
            dimension_semantics=("parallel", "arbitrary"),
            vmem_limit_bytes=_vmem_limit(need_dn),
        ),
    )(x2, prepared["w_down_t"])

    # ---- stage 2: fused frozen linear + bias + LoRA up projection ----------
    need = (2 * cd_bytes * (tm_eff * tk_eff + tk_eff * tn_eff
                            + tm_eff * r_pad + r_pad * tn_eff)
            + 2 * 4 * tn_eff
            + 2 * out_bytes * tm_eff * tn_eff
            + 4 * tm_eff * tn_eff)

    out2 = pl.pallas_call(
        _lora_main_kernel,
        out_shape=jax.ShapeDtypeStruct((M_pad, N_pad), out_dtype),
        grid_spec=pltpu.PrefetchScalarGridSpec(
            num_scalar_prefetch=0,
            grid=(M_pad // tm_eff, N_pad // tn_eff, K_pad // tk_eff),
            in_specs=[
                pl.BlockSpec((tm_eff, tk_eff), lambda i, j, k: (i, k)),  # x
                pl.BlockSpec((tk_eff, tn_eff), lambda i, j, k: (k, j)),  # W_org^T
                pl.BlockSpec((1, tn_eff), lambda i, j, k: (0, j)),       # bias
                pl.BlockSpec((tm_eff, r_pad), lambda i, j, k: (i, 0)),   # lx
                pl.BlockSpec((r_pad, tn_eff), lambda i, j, k: (0, j)),   # W_up^T
            ],
            out_specs=pl.BlockSpec((tm_eff, tn_eff), lambda i, j, k: (i, j)),
            scratch_shapes=[pltpu.VMEM((tm_eff, tn_eff), jnp.float32)],
        ),
        compiler_params=pltpu.CompilerParams(
            # lx is precomputed -> no cross-j dependency -> N is parallel too
            # (keeps both TensorCores busy on v7x).
            dimension_semantics=("parallel", "parallel", "arbitrary"),
            vmem_limit_bytes=_vmem_limit(need),
        ),
    )(x2, prepared["w_org_t"], prepared["b2"], lx, prepared["w_up_t"])

    return out2[:M, :out_dim].reshape(*lead_shape, out_dim)


# ---------------------------------------------------------------------------
# Reference / test
# ---------------------------------------------------------------------------

def lora_linear_reference(x, w_org, b_org, w_down, w_up, *, multiplier, scale):
    org = jnp.einsum("...i,oi->...o", x, w_org) + b_org
    lx = jnp.einsum("...i,ri->...r", x, w_down)
    lup = jnp.einsum("...r,or->...o", lx, w_up)
    return org + lup * multiplier * scale


def _make_params(key, in_dim, out_dim, lora_dim):
    korg, kb, kdown, kup = jax.random.split(key, 4)
    w_org = jax.random.normal(korg, (out_dim, in_dim), jnp.float32) * 0.05
    b_org = jax.random.normal(kb, (out_dim,), jnp.float32) * 0.01
    # lora_down: kaiming_uniform_(a=sqrt(5)) -> U(-1/sqrt(fan_in), 1/sqrt(fan_in))
    bound = 1.0 / math.sqrt(in_dim)
    w_down = jax.random.uniform(kdown, (lora_dim, in_dim), jnp.float32,
                                minval=-bound, maxval=bound)
    # NOTE: torch init zeros lora_up; use small random values so the LoRA
    # branch is actually exercised numerically.
    w_up = jax.random.normal(kup, (out_dim, lora_dim), jnp.float32) * 0.02
    return w_org, b_org, w_down, w_up


if __name__ == "__main__":
    key = jax.random.PRNGKey(0)
    k1, k2, k3, k4 = jax.random.split(key, 4)

    # --- Test 1: shapes matching the Linear branch of LoRAModule. ---
    B, S, in_dim, out_dim, lora_dim = 2, 8, 128, 128, 32
    alpha, multiplier = 16.0, 0.8
    scale = alpha / lora_dim                      # self.scale in the module

    x = jax.random.normal(k1, (B, S, in_dim), dtype=jnp.float32)
    w_org, b_org, w_down, w_up = _make_params(k2, in_dim, out_dim, lora_dim)

    prepared = prepare_lora_linear(w_org, b_org, w_down, w_up,
                                   multiplier=multiplier, scale=scale)
    out = lora_linear_forward(x, prepared)
    out = jax.block_until_ready(out)
    ref = lora_linear_reference(x, w_org, b_org, w_down, w_up,
                                multiplier=multiplier, scale=scale)
    assert out.shape == (B, S, out_dim)
    # bf16 compute path vs f32 reference -> widened tolerance.
    assert jnp.allclose(out, ref, atol=2e-2, rtol=2e-2), "mismatch (test 1)"

    # --- Test 2: ragged / non-128-multiple shapes; forces multi-step K/N
    #     tiling, M padding and the precomputed-lx reuse across j tiles. ---
    B2, S2, in2, out2d, r2 = 3, 5, 200, 300, 8
    x2 = jax.random.normal(k3, (B2, S2, in2), dtype=jnp.float32)
    w_org2, b_org2, w_down2, w_up2 = _make_params(k4, in2, out2d, r2)

    prepared2 = prepare_lora_linear(w_org2, b_org2, w_down2, w_up2,
                                    multiplier=1.0, scale=1.0, tn=128, tk=128)
    out_b = lora_linear_forward(x2, prepared2)
    out_b = jax.block_until_ready(out_b)
    ref_b = lora_linear_reference(x2, w_org2, b_org2, w_down2, w_up2,
                                  multiplier=1.0, scale=1.0)
    assert out_b.shape == (B2, S2, out2d)
    assert jnp.allclose(out_b, ref_b, atol=2e-2, rtol=2e-2), "mismatch (test 2)"

    print("KERNEL_OK")
</pallas_src>

<mosaic_0001>
module attributes {stable_mosaic.version = 11 : i64} {
  func.func @_lora_down_kernel(%arg0: i32, %arg1: i32, %arg2: memref<16x128xbf16, #tpu.memory_space<vmem>>, %arg3: memref<128x128xbf16, #tpu.memory_space<vmem>>, %arg4: memref<16x128xbf16, #tpu.memory_space<vmem>>, %arg5: memref<16x128xf32, #tpu.memory_space<vmem>>) attributes {dimension_semantics = [#tpu.dimension_semantics<parallel>, #tpu.dimension_semantics<arbitrary>], iteration_bounds = array<i64: 1, 1>, scalar_prefetch = 0 : i64, scratch_operands = 1 : i64, tpu.core_type = #tpu.core_type<tc>, window_params = [{transform_indices = @transform_0, window_bounds = array<i64: 16, 128>}, {transform_indices = @transform_1, window_bounds = array<i64: 128, 128>}, {transform_indices = @transform_2, window_bounds = array<i64: 16, 128>}]} {
    %c0_i32 = arith.constant 0 : i32
    %0 = arith.cmpi eq, %arg1, %c0_i32 : i32
    %1 = arith.extui %0 : i1 to i32
    %c0_i32_0 = arith.constant 0 : i32
    %2 = arith.cmpi ne, %1, %c0_i32_0 : i32
    scf.if %2 {
      %cst_10 = arith.constant 0.000000e+00 : f32
      %12 = vector.broadcast %cst_10 : f32 to vector<16x128xf32>
      %c0_11 = arith.constant 0 : index
      %c0_12 = arith.constant 0 : index
      %13 = vector.load %arg5[%c0_11, %c0_12] : memref<16x128xf32, #tpu.memory_space<vmem>>, vector<16x128xf32>
      tpu.vector_store %arg5[%c0_11, %c0_12], %12 {strides = array<i32>} : memref<16x128xf32, #tpu.memory_space<vmem>>, vector<16x128xf32>,
    } else {
    }
    %c0 = arith.constant 0 : index
    %c0_1 = arith.constant 0 : index
    %3 = vector.load %arg5[%c0, %c0_1] : memref<16x128xf32, #tpu.memory_space<vmem>>, vector<16x128xf32>
    %c0_2 = arith.constant 0 : index
    %c0_3 = arith.constant 0 : index
    %4 = vector.load %arg2[%c0_2, %c0_3] : memref<16x128xbf16, #tpu.memory_space<vmem>>, vector<16x128xbf16>
    %c0_4 = arith.constant 0 : index
    %c0_5 = arith.constant 0 : index
    %5 = vector.load %arg3[%c0_4, %c0_5] : memref<128x128xbf16, #tpu.memory_space<vmem>>, vector<128x128xbf16>
    %cst = arith.constant dense<0.000000e+00> : vector<16x128xf32>
    %6 = tpu.matmul %4, %5, %cst {dimension_numbers = #tpu.dot_dimension_numbers<[1], [0], [0], [1], [0, 0, 1, 1], [], []>} : vector<16x128xbf16>, vector<128x128xbf16>, vector<16x128xf32> -> vector<16x128xf32>
    %7 = arith.addf %3, %6 : vector<16x128xf32>
    %c0_6 = arith.constant 0 : index
    %c0_7 = arith.constant 0 : index
    %8 = vector.load %arg5[%c0_6, %c0_7] : memref<16x128xf32, #tpu.memory_space<vmem>>, vector<16x128xf32>
    tpu.vector_store %arg5[%c0_6, %c0_7], %7 {strides = array<i32>} : memref<16x128xf32, #tpu.memory_space<vmem>>, vector<16x128xf32>,
    %c0_i32_8 = arith.constant 0 : i32
    %9 = arith.cmpi eq, %arg1, %c0_i32_8 : i32
    %10 = arith.extui %9 : i1 to i32
    %c0_i32_9 = arith.constant 0 : i32
    %11 = arith.cmpi ne, %10, %c0_i32_9 : i32
    scf.if %11 {
      %c0_10 = arith.constant 0 : index
      %c0_11 = arith.constant 0 : index
      %12 = vector.load %arg5[%c0_10, %c0_11] : memref<16x128xf32, #tpu.memory_space<vmem>>, vector<16x128xf32>
      %13 = arith.truncf %12 : vector<16x128xf32> to vector<16x128xbf16>
      %c0_12 = arith.constant 0 : index
      %c0_13 = arith.constant 0 : index
      %14 = vector.load %arg4[%c0_12, %c0_13] : memref<16x128xbf16, #tpu.memory_space<vmem>>, vector<16x128xbf16>
      tpu.vector_store %arg4[%c0_12, %c0_13], %13 {strides = array<i32>} : memref<16x128xbf16, #tpu.memory_space<vmem>>, vector<16x128xbf16>,
    } else {
    }
    return
  }
  func.func @transform_0(%arg0: i32, %arg1: i32) -> (i32, i32) {
    %c0_i32 = arith.constant 0 : i32
    return %arg0, %arg1 : i32, i32
  }
  func.func @transform_1(%arg0: i32, %arg1: i32) -> (i32, i32) {
    %c0_i32 = arith.constant 0 : i32
    %c0_i32_0 = arith.constant 0 : i32
    return %arg1, %c0_i32 : i32, i32
  }
  func.func @transform_2(%arg0: i32, %arg1: i32) -> (i32, i32) {
    %c0_i32 = arith.constant 0 : i32
    %c0_i32_0 = arith.constant 0 : i32
    return %arg0, %c0_i32 : i32, i32
  }
}

</mosaic_0001>

<llo_original>
// kernel: tpu_custom_call.1
$region0: #{tpu_custom_call.1}
  #allocation0 [shape = 'u32[]', space=smem, size = 0x4, offset = 0x4, fixed_abs, tag = 'smem constant byte address 0x4 - core index']
  #allocation1 [shape = 'u32[72,128]{1,0:T(1,128)}', space=vmem, size = 0x9000, scoped, tag = 'internal scratch']
  #allocation2 [shape = 'f32[16,128]{1,0:T(8,128)}', space=vmem, size = 0x2000, scoped, tag = 'scratch operand']
  %s0 = inlined_call_operand.hbm [shape: bf16[16,128], index: 0, kind: input, shape index: {}]
  %s1 = inlined_call_operand.hbm [shape: bf16[128,128], index: 1, kind: input, shape index: {}]
  %s2 = inlined_call_operand.hbm [shape: bf16[16,128], index: 2, kind: output, shape index: {}]
  %s3 = sld [smem:[#allocation0]]
  $region34: #{tpu_custom_call.1} parent=0
    _
  %s5 = ssub.s32 1, %s3
  %s6 = scalar_select 0, %s5, %s3
  $region1: #{tpu_custom_call.1} parent=0
    #allocation3 [shape = 'u8[4096]{0}', space=vmem, size = 0x1000, scoped, tag = 'input window, operand 0, single buffered']
    #allocation4 [shape = 's32[1]{0}', space=sflag, size = 0x4, scoped, tag = 'scoped memory for tpu_custom_call.1']
    #allocation5 [shape = 's32[1]{0}', space=sflag, size = 0x4, scoped, tag = 'scoped memory for tpu_custom_call.1']
    #allocation6 [shape = 'u8[32768]{0}', space=vmem, size = 0x8000, scoped, tag = 'input window, operand 1, single buffered']
    #allocation7 [shape = 's32[1]{0}', space=sflag, size = 0x4, scoped, tag = 'scoped memory for tpu_custom_call.1']
    #allocation8 [shape = 'u8[4096]{0}', space=vmem, size = 0x1000, scoped, tag = 'output window, operand 0, single buffered']
    %7 = vsyncpa [#allocation4], 0
    %8 = vsyncpa [#allocation7], 0
    %9 = vsyncpa [#allocation5], 0
    // Predicated region
    $region2: #{tpu_custom_call.1} parent=1 // pred_check
      _
    $region3: #{tpu_custom_call.1} parent=1 // pred_check_branch
      %11 = sbr.rel (0) target = $region5
    $region4: #{tpu_custom_call.1} parent=1 // pred_region
      %13 = vsyncadd [#allocation4], 0
      %s14 = sshll.u32 %s0, 4
      %s15 = int_to_ptr.hbm [resolvable:$true] %s14
      %s16 = sshll.u32 [#allocation3], 4
      %s17 = int_to_ptr.vmem [resolvable:$true] %s16
      %22 = dma.hbm_to_vmem [thread:$0]  %s15, 128, %s17, [#allocation4], 64, 64, 4
    $region5: #{tpu_custom_call.1} parent=1 // pred_fallthru
      _
    // Predicated region
    $region6: #{tpu_custom_call.1} parent=1 // pred_check
      _
    $region7: #{tpu_custom_call.1} parent=1 // pred_check_branch
      %24 = sbr.rel (0) target = $region9
    $region8: #{tpu_custom_call.1} parent=1 // pred_region
      %26 = vsyncadd [#allocation7], 0
      %s27 = sshll.u32 %s1, 4
      %s28 = int_to_ptr.hbm [resolvable:$true] %s27
      %s29 = sshll.u32 [#allocation6], 4
      %s30 = int_to_ptr.vmem [resolvable:$true] %s29
      %35 = dma.hbm_to_vmem [thread:$0]  %s28, 1024, %s30, [#allocation7], 64, 64, 4
    $region9: #{tpu_custom_call.1} parent=1 // pred_fallthru
      _
    // Predicated region
    $region10: #{tpu_custom_call.1} parent=1 // pred_check
      _
    $region11: #{tpu_custom_call.1} parent=1 // pred_check_branch
      %37 = sbr.rel (0) target = $region13
    $region12: #{tpu_custom_call.1} parent=1 // pred_region
      %39 = dma.done [#allocation4], 128
    $region13: #{tpu_custom_call.1} parent=1 // pred_fallthru
      _
    // Predicated region
    $region14: #{tpu_custom_call.1} parent=1 // pred_check
      _
    $region15: #{tpu_custom_call.1} parent=1 // pred_check_branch
      %41 = sbr.rel (0) target = $region17
    $region16: #{tpu_custom_call.1} parent=1 // pred_region
      %43 = dma.done [#allocation7], 1024
    $region17: #{tpu_custom_call.1} parent=1 // pred_fallthru
      _
    %p44 = scmp.eq.s32.totalorder 0, 0
    // Predicated region
    $region18: #{tpu_custom_call.1} parent=1 // pred_check
      %p45 = pneg %p44
    $region19: #{tpu_custom_call.1} parent=1 // pred_check_branch
      %47 = sbr.rel (%p45) target = $region21
    $region20: #{tpu_custom_call.1} parent=1 // pred_region
      %48 = vst [vmem:[#allocation2] sm:$0xff] 0.0
      %49 = vst [vmem:[#allocation2 + $0x8] sm:$0xff] 0.0
    $region21: #{tpu_custom_call.1} parent=1 // pred_fallthru
      _
    %v50 = vld [vmem:[#allocation2] sm:$0xff]
    %v51 = vld [vmem:[#allocation2 + $0x8] sm:$0xff]
    %v52 = vld [vmem:[#allocation3] sm:$0xf]
    %v53 = vld [vmem:[#allocation3 + $0x4] sm:$0xf]
    %v54 = vld [vmem:[#allocation6] sm:$0xf]
    %v55 = vld [vmem:[#allocation6 + $0x4] sm:$0xf]
    %v56 = vld [vmem:[#allocation6 + $0x8] sm:$0xf]
    %v57 = vld [vmem:[#allocation6 + $0xc] sm:$0xf]
    %v58 = vld [vmem:[#allocation6 + $0x10] sm:$0xf]
    %v59 = vld [vmem:[#allocation6 + $0x14] sm:$0xf]
    %v60 = vld [vmem:[#allocation6 + $0x18] sm:$0xf]
    %v61 = vld [vmem:[#allocation6 + $0x1c] sm:$0xf]
    %v62 = vld [vmem:[#allocation6 + $0x20] sm:$0xf]
    %v63 = vld [vmem:[#allocation6 + $0x24] sm:$0xf]
    %v64 = vld [vmem:[#allocation6 + $0x28] sm:$0xf]
    %v65 = vld [vmem:[#allocation6 + $0x2c] sm:$0xf]
    %v66 = vld [vmem:[#allocation6 + $0x30] sm:$0xf]
    %v67 = vld [vmem:[#allocation6 + $0x34] sm:$0xf]
    %v68 = vld [vmem:[#allocation6 + $0x38] sm:$0xf]
    %v69 = vld [vmem:[#allocation6 + $0x3c] sm:$0xf]
    %v72 = vunpack.c.l.b16 %v52
    %v73 = vunpack.c.l.b16 %v53
    %v74 = vpack.c.b16 %v73, %v72
    %v92 = vunpack.c.l.b16 %v54
    %v93 = vunpack.c.l.b16 %v55
    %v94 = vunpack.c.l.b16 %v56
    %v95 = vunpack.c.l.b16 %v57
    %v96 = vunpack.c.l.b16 %v58
    %v97 = vunpack.c.l.b16 %v59
    %v98 = vunpack.c.l.b16 %v60
    %v99 = vunpack.c.l.b16 %v61
    %v100 = vunpack.c.l.b16 %v62
    %v101 = vunpack.c.l.b16 %v63
    %v102 = vunpack.c.l.b16 %v64
    %v103 = vunpack.c.l.b16 %v65
    %v104 = vunpack.c.l.b16 %v66
    %v105 = vunpack.c.l.b16 %v67
    %v106 = vunpack.c.l.b16 %v68
    %v107 = vunpack.c.l.b16 %v69
    %v108 = vpack.c.b16 %v93, %v92
    %v109 = vpack.c.b16 %v95, %v94
    %v110 = vpack.c.b16 %v97, %v96
    %v111 = vpack.c.b16 %v99, %v98
    %v112 = vpack.c.b16 %v101, %v100
    %v113 = vpack.c.b16 %v103, %v102
    %v114 = vpack.c.b16 %v105, %v104
    %v115 = vpack.c.b16 %v107, %v106
    %124 = vmatpush.bf16.msra.mxu0 %v115
    %125 = vmatpush.bf16.msra.mxu0 %v114
    %126 = vmatpush.bf16.msra.mxu0 %v113
    %127 = vmatpush.bf16.msra.mxu0 %v112
    %128 = vmatpush.bf16.msra.mxu0 %v111
    %129 = vmatpush.bf16.msra.mxu0 %v110
    %130 = vmatpush.bf16.msra.mxu0 %v109
    %131 = vmatpush.bf16.msra.mxu0 %v108
    %132 = vmatmul.bf16.gmra.mxu0 %v74
    %v133 = vpop.f32.mrf.mxu0
    %v134 = vadd.f32 0.0, %v133
    %v135 = vpop.f32.mrf.mxu0
    %v136 = vadd.f32 0.0, %v135
    %137 = vdwg.mxu0
    %v138 = vadd.f32 %v50, %v134
    %v139 = vadd.f32 %v51, %v136
    %140 = vst [vmem:[#allocation2] sm:$0xff] %v138
    %141 = vst [vmem:[#allocation2 + $0x8] sm:$0xff] %v139
    // Predicated region
    $region22: #{tpu_custom_call.1} parent=1 // pred_check
      %p142 = pneg %p44
    $region23: #{tpu_custom_call.1} parent=1 // pred_check_branch
      %144 = sbr.rel (%p142) target = $region25
    $region24: #{tpu_custom_call.1} parent=1 // pred_region
      %v145 = vld [vmem:[#allocation2] sm:$0xff]
      %v146 = vld [vmem:[#allocation2 + $0x8] sm:$0xff]
      %v147 = vpack.c.bf16 %v145, %v145
      %v148 = vpack.c.bf16 %v146, %v146
      %149 = vst [vmem:[#allocation8] sm:$0xf] %v147
      %150 = vst [vmem:[#allocation8 + $0x4] sm:$0xf] %v148
    $region25: #{tpu_custom_call.1} parent=1 // pred_fallthru
      _
    // Predicated region
    $region26: #{tpu_custom_call.1} parent=1 // pred_check
      _
    $region27: #{tpu_custom_call.1} parent=1 // pred_check_branch
      %152 = sbr.rel (0) target = $region29
    $region28: #{tpu_custom_call.1} parent=1 // pred_region
      %154 = vsyncadd [#allocation5], 0
      %s155 = sshll.u32 [#allocation8], 4
      %s156 = int_to_ptr.vmem [resolvable:$true] %s155
      %s157 = sshll.u32 %s2, 4
      %s158 = int_to_ptr.hbm [resolvable:$true] %s157
      %163 = dma.vmem_to_hbm [thread:$0]  %s156, 128, %s158, [#allocation5], 64, 64, 4
    $region29: #{tpu_custom_call.1} parent=1 // pred_fallthru
      _
    // Predicated region
    $region30: #{tpu_custom_call.1} parent=1 // pred_check
      _
    $region31: #{tpu_custom_call.1} parent=1 // pred_check_branch
      %165 = sbr.rel (0) target = $region33
    $region32: #{tpu_custom_call.1} parent=1 // pred_region
      %167 = dma.done [#allocation5], 128
    $region33: #{tpu_custom_call.1} parent=1 // pred_fallthru
      _
    %168 = vsyncpa [#allocation4], 1
    %169 = vsyncpa [#allocation7], 1
    %170 = vsyncpa [#allocation5], 1

</llo_original>
